<compile_context>
chip_gen: v5e
topology: v5e:2x2
jax: 0.10.0
libtpu: 0.0.40
codegen_flags: <defaults>
</compile_context>

<pallas_src>
import functools

import jax
import jax.numpy as jnp
from jax.experimental import pallas as pl
from jax.experimental.pallas import tpu as pltpu


def neutral_kernel(x_ref, wa_ref, m_ref, enc_ref, o_ref):
    bb = x_ref.shape[0]                  # batch rows handled by this grid step
    n_trans, hp, _ = m_ref.shape         # 11 transforms, hp = 32 (padded hidden width)
    n_views = n_trans + 1
    r_pad = enc_ref.shape[1]             # 128 (lane-padded representation width)
    n_enc = enc_ref.shape[0] // hp       # encoder layers packed (layers 1.. + head)

    assert wa_ref.shape[1] == n_views * hp
    assert o_ref.shape[1] == n_views * r_pad

    x = x_ref[...]                                                     # (bb, F)

    # ---- matmul 1: all first transform layers + encoder layer-0, column fused ----
    # wa = [W1_0 | W1_1 | ... | W1_{T-1} | We0], each block hp lanes wide (zero padded)
    haug = jnp.dot(x, wa_ref[...], preferred_element_type=jnp.float32)  # (bb, V*hp)

    base = haug[:, n_trans * hp:(n_trans + 1) * hp]                     # x @ We0 (no ReLU)

    # per-transform hidden activations, stacked on a leading "transform" axis (vregs)
    h_t = jnp.stack([haug[:, t * hp:(t + 1) * hp] for t in range(n_trans)], axis=0)
    h_t = jnp.maximum(h_t, 0.0)                                         # (T, bb, hp)

    # ---- matmul 2 (batched over transforms): the W2_t @ We0 fold ----
    # pre[t] = relu(x @ W1_t) @ (W2_t @ We0)
    pre = jnp.einsum('tbh,thk->tbk', h_t, m_ref[...],
                     preferred_element_type=jnp.float32)                # (T, bb, hp)

    # encoder layer-0 activations of every view, stacked along rows (view-major);
    # view 0 is the identity view: relu(x @ We0).
    l_trans = jnp.maximum(pre + base[None, :, :], 0.0).reshape(n_trans * bb, hp)
    l = jnp.concatenate([jnp.maximum(base, 0.0), l_trans], axis=0)      # (V*bb, hp)

    # ---- shared encoder layers 1..n-1 + head, run ONCE on the stacked rows ----
    for i in range(n_enc - 1):
        w = enc_ref[i * hp:(i + 1) * hp, 0:hp]                          # (hp, hp)
        l = jnp.maximum(jnp.dot(l, w, preferred_element_type=jnp.float32), 0.0)
    w_head = enc_ref[(n_enc - 1) * hp:n_enc * hp, :]                    # (hp, r_pad)
    z = jnp.dot(l, w_head, preferred_element_type=jnp.float32)          # (V*bb, r_pad)
    z = z.astype(o_ref.dtype)

    # ---- lane-dense output: 128-lane-aligned, unmasked vreg stores ----
    for v in range(n_views):
        o_ref[:, v * r_pad:(v + 1) * r_pad] = z[v * bb:(v + 1) * bb, :]


def prepare_params(trans_w1, trans_w2, enc_ws, hp=32, r_pad=128, dtype=jnp.float32):
    """One-time weight fusion / padding (hoisted out of the inference path).

    trans_w1: (T, F, Ht), trans_w2: (T, Ht, F), enc_ws: bias-free encoder weights
    [(F, H), (H, H), ..., (H, R)].  Returns (wa, m_stack, enc_pack).
    """
    n_trans, n_feat, ht = trans_w1.shape
    h0 = enc_ws[0].shape[1]
    rep = enc_ws[-1].shape[1]
    assert ht <= hp and h0 <= hp and rep <= r_pad
    assert all(w.shape[0] <= hp for w in enc_ws[1:])
    assert all(w.shape[1] <= hp for w in enc_ws[1:-1])

    f32 = jnp.float32
    hi = jax.lax.Precision.HIGHEST

    # wa: (F, (T+1)*hp). Block t < T holds W1_t; block T holds We0 (for the base term).
    blocks = jnp.zeros((n_trans + 1, n_feat, hp), f32)
    blocks = blocks.at[:n_trans, :, :ht].set(trans_w1.astype(f32))
    blocks = blocks.at[n_trans, :, :h0].set(enc_ws[0].astype(f32))
    wa = jnp.transpose(blocks, (1, 0, 2)).reshape(n_feat, (n_trans + 1) * hp)

    # m_stack: (T, hp, hp); block t = W2_t @ We0 (transform layer-2 / encoder layer-0
    # fold), zero padded to the lane-friendly hp width.
    fold = jnp.einsum('thf,fk->thk', trans_w2.astype(f32), enc_ws[0].astype(f32),
                      precision=hi)
    m_stack = jnp.zeros((n_trans, hp, hp), f32).at[:, :ht, :h0].set(fold)

    # enc_pack: ((n_layers-1)*hp, r_pad): encoder layers 1.. + head, row-stacked.
    n_rest = len(enc_ws) - 1
    enc_pack = jnp.zeros((n_rest * hp, r_pad), f32)
    for i, w in enumerate(enc_ws[1:]):
        enc_pack = enc_pack.at[i * hp:i * hp + w.shape[0], :w.shape[1]].set(w.astype(f32))

    return wa.astype(dtype), m_stack.astype(dtype), enc_pack.astype(dtype)


@functools.partial(jax.jit, static_argnames=("rep_dim", "batch_block"))
def tab_neutral_ad_forward(x, wa, m_stack, enc_pack, rep_dim, batch_block=None):
    """x: (B, F). Returns (B, n_trans + 1, rep_dim), same semantics as
    TabNeutralADNet.forward with trans_type='residual' (view 0 = identity)."""
    b, n_feat = x.shape
    n_trans, hp, _ = m_stack.shape
    n_views = n_trans + 1
    r_pad = enc_pack.shape[1]

    bb = b if batch_block is None else batch_block
    assert b % bb == 0
    grid = (b // bb,)

    out = pl.pallas_call(
        neutral_kernel,
        out_shape=jax.ShapeDtypeStruct((b, n_views * r_pad), x.dtype),
        grid=grid,
        in_specs=[
            pl.BlockSpec((bb, n_feat), lambda i: (i, 0)),
            pl.BlockSpec(wa.shape, lambda i: (0, 0)),
            pl.BlockSpec(m_stack.shape, lambda i: (0, 0, 0)),
            pl.BlockSpec(enc_pack.shape, lambda i: (0, 0)),
        ],
        out_specs=pl.BlockSpec((bb, n_views * r_pad), lambda i: (i, 0)),
        compiler_params=pltpu.CompilerParams(
            dimension_semantics=("parallel",)),
    )(x, wa, m_stack, enc_pack)

    # free reshape (row-major bitcast) + small slice; no transpose needed because each
    # view already occupies its own 128-lane column block.
    return out.reshape(b, n_views, r_pad)[:, :, :rep_dim]


if __name__ == "__main__":
    key = jax.random.PRNGKey(0)

    # module defaults: n_trans=11, trans_hidden_dims=24, enc_hidden_dims='24,24,24,24',
    # rep_dim=24, activation=ReLU, bias=False, trans_type='residual'
    B, F = 8, 16
    n_trans, Ht, R = 11, 24, 24
    enc_hidden = [24, 24, 24, 24]
    scale = 0.1

    keys = jax.random.split(key, 3 + len(enc_hidden) + 1)
    trans_w1 = jax.random.normal(keys[0], (n_trans, F, Ht), jnp.float32) * scale
    trans_w2 = jax.random.normal(keys[1], (n_trans, Ht, F), jnp.float32) * scale
    dims = [F] + enc_hidden + [R]
    enc_ws = [jax.random.normal(keys[2 + i], (dims[i], dims[i + 1]), jnp.float32) * scale
              for i in range(len(dims) - 1)]
    x = jax.random.normal(keys[-1], (B, F), jnp.float32)

    # one-time weight fusion / padding (hoisted out of the per-call forward)
    params = jax.block_until_ready(prepare_params(trans_w1, trans_w2, enc_ws))

    zs = jax.block_until_ready(tab_neutral_ad_forward(x, *params, rep_dim=R))

    # pure-JAX reference mirroring TabNeutralADNet.forward (trans_type='residual')
    def reference(x):
        def enc(h):
            for w in enc_ws[:-1]:
                h = jnp.maximum(h @ w, 0.0)
            return h @ enc_ws[-1]
        outs = [enc(x)]
        for i in range(n_trans):
            mask = jnp.maximum(x @ trans_w1[i], 0.0) @ trans_w2[i]
            outs.append(enc(mask + x))
        return jnp.stack(outs, axis=1)

    ref = reference(x)
    assert zs.shape == (B, n_trans + 1, R), zs.shape
    # Tolerance allows for the W2@We0 algebraic refactoring under TPU matmul rounding
    # (the fold reassociates the encoder layer-0 contraction).
    err = float(jnp.max(jnp.abs(zs - ref)))
    assert err < 1e-3, f"max abs diff vs reference: {err}"
    print("KERNEL_OK")
</pallas_src>

<mosaic_0001>
module attributes {stable_mosaic.version = 11 : i64} {
  func.func @neutral_kernel(%arg0: i32, %arg1: memref<8x16xf32, #tpu.memory_space<vmem>>, %arg2: memref<16x384xf32, #tpu.memory_space<vmem>>, %arg3: memref<11x32x32xf32, #tpu.memory_space<vmem>>, %arg4: memref<128x128xf32, #tpu.memory_space<vmem>>, %arg5: memref<8x1536xf32, #tpu.memory_space<vmem>>) attributes {dimension_semantics = [#tpu.dimension_semantics<parallel>], iteration_bounds = array<i64: 1>, scalar_prefetch = 0 : i64, scratch_operands = 0 : i64, tpu.core_type = #tpu.core_type<tc>, window_params = [{transform_indices = @transform_0, window_bounds = array<i64: 8, 16>}, {pipeline_mode = #tpu.pipeline_mode<synchronous>, transform_indices = @transform_1, window_bounds = array<i64: 16, 384>}, {pipeline_mode = #tpu.pipeline_mode<synchronous>, transform_indices = @transform_2, window_bounds = array<i64: 11, 32, 32>}, {pipeline_mode = #tpu.pipeline_mode<synchronous>, transform_indices = @transform_3, window_bounds = array<i64: 128, 128>}, {transform_indices = @transform_4, window_bounds = array<i64: 8, 1536>}]} {
    %c0 = arith.constant 0 : index
    %c0_0 = arith.constant 0 : index
    %0 = vector.load %arg1[%c0, %c0_0] : memref<8x16xf32, #tpu.memory_space<vmem>>, vector<8x16xf32>
    %c0_1 = arith.constant 0 : index
    %c0_2 = arith.constant 0 : index
    %1 = vector.load %arg2[%c0_1, %c0_2] : memref<16x384xf32, #tpu.memory_space<vmem>>, vector<16x384xf32>
    %cst = arith.constant dense<0.000000e+00> : vector<8x384xf32>
    %2 = tpu.matmul %0, %1, %cst {dimension_numbers = #tpu.dot_dimension_numbers<[1], [0], [0], [1], [0, 0, 1, 1], [], []>} : vector<8x16xf32>, vector<16x384xf32>, vector<8x384xf32> -> vector<8x384xf32>
    %3 = vector.extract_strided_slice %2 {offsets = [0, 352], sizes = [8, 32], strides = [1, 1]} : vector<8x384xf32> to vector<8x32xf32>
    %4 = vector.extract_strided_slice %2 {offsets = [0, 0], sizes = [8, 32], strides = [1, 1]} : vector<8x384xf32> to vector<8x32xf32>
    %5 = vector.extract_strided_slice %2 {offsets = [0, 32], sizes = [8, 32], strides = [1, 1]} : vector<8x384xf32> to vector<8x32xf32>
    %6 = vector.extract_strided_slice %2 {offsets = [0, 64], sizes = [8, 32], strides = [1, 1]} : vector<8x384xf32> to vector<8x32xf32>
    %7 = vector.extract_strided_slice %2 {offsets = [0, 96], sizes = [8, 32], strides = [1, 1]} : vector<8x384xf32> to vector<8x32xf32>
    %8 = vector.extract_strided_slice %2 {offsets = [0, 128], sizes = [8, 32], strides = [1, 1]} : vector<8x384xf32> to vector<8x32xf32>
    %9 = vector.extract_strided_slice %2 {offsets = [0, 160], sizes = [8, 32], strides = [1, 1]} : vector<8x384xf32> to vector<8x32xf32>
    %10 = vector.extract_strided_slice %2 {offsets = [0, 192], sizes = [8, 32], strides = [1, 1]} : vector<8x384xf32> to vector<8x32xf32>
    %11 = vector.extract_strided_slice %2 {offsets = [0, 224], sizes = [8, 32], strides = [1, 1]} : vector<8x384xf32> to vector<8x32xf32>
    %12 = vector.extract_strided_slice %2 {offsets = [0, 256], sizes = [8, 32], strides = [1, 1]} : vector<8x384xf32> to vector<8x32xf32>
    %13 = vector.extract_strided_slice %2 {offsets = [0, 288], sizes = [8, 32], strides = [1, 1]} : vector<8x384xf32> to vector<8x32xf32>
    %14 = vector.extract_strided_slice %2 {offsets = [0, 320], sizes = [8, 32], strides = [1, 1]} : vector<8x384xf32> to vector<8x32xf32>
    %15 = vector.shape_cast %4 : vector<8x32xf32> to vector<1x8x32xf32>
    %16 = vector.shape_cast %5 : vector<8x32xf32> to vector<1x8x32xf32>
    %17 = vector.shape_cast %6 : vector<8x32xf32> to vector<1x8x32xf32>
    %18 = vector.shape_cast %7 : vector<8x32xf32> to vector<1x8x32xf32>
    %19 = vector.shape_cast %8 : vector<8x32xf32> to vector<1x8x32xf32>
    %20 = vector.shape_cast %9 : vector<8x32xf32> to vector<1x8x32xf32>
    %21 = vector.shape_cast %10 : vector<8x32xf32> to vector<1x8x32xf32>
    %22 = vector.shape_cast %11 : vector<8x32xf32> to vector<1x8x32xf32>
    %23 = vector.shape_cast %12 : vector<8x32xf32> to vector<1x8x32xf32>
    %24 = vector.shape_cast %13 : vector<8x32xf32> to vector<1x8x32xf32>
    %25 = vector.shape_cast %14 : vector<8x32xf32> to vector<1x8x32xf32>
    %26 = tpu.concatenate %15, %16, %17, %18, %19, %20, %21, %22, %23, %24, %25 in 0 : vector<1x8x32xf32>, vector<1x8x32xf32>, vector<1x8x32xf32>, vector<1x8x32xf32>, vector<1x8x32xf32>, vector<1x8x32xf32>, vector<1x8x32xf32>, vector<1x8x32xf32>, vector<1x8x32xf32>, vector<1x8x32xf32>, vector<1x8x32xf32> -> vector<11x8x32xf32>
    %cst_3 = arith.constant 0.000000e+00 : f32
    %27 = vector.broadcast %cst_3 : f32 to vector<11x8x32xf32>
    %28 = arith.maximumf %26, %27 : vector<11x8x32xf32>
    %c0_4 = arith.constant 0 : index
    %c0_5 = arith.constant 0 : index
    %c0_6 = arith.constant 0 : index
    %29 = vector.load %arg3[%c0_4, %c0_5, %c0_6] : memref<11x32x32xf32, #tpu.memory_space<vmem>>, vector<11x32x32xf32>
    "tpu.trace_start"() <{level = 10 : i32, message = "tbh,thk->tbk"}> : () -> ()
    %cst_7 = arith.constant dense<0.000000e+00> : vector<11x8x32xf32>
    %30 = tpu.matmul %28, %29, %cst_7 {dimension_numbers = #tpu.dot_dimension_numbers<[2], [1], [1], [2], [0, 0, 0, 1, 1, 2], [0], [0]>} : vector<11x8x32xf32>, vector<11x32x32xf32>, vector<11x8x32xf32> -> vector<11x8x32xf32>
    "tpu.trace_stop"() : () -> ()
    %31 = vector.shape_cast %3 : vector<8x32xf32> to vector<1x8x32xf32>
    %32 = vector.broadcast %31 : vector<1x8x32xf32> to vector<11x8x32xf32>
    %33 = arith.addf %30, %32 : vector<11x8x32xf32>
    %cst_8 = arith.constant 0.000000e+00 : f32
    %34 = vector.broadcast %cst_8 : f32 to vector<11x8x32xf32>
    %35 = arith.maximumf %33, %34 : vector<11x8x32xf32>
    %36 = vector.shape_cast %35 : vector<11x8x32xf32> to vector<88x32xf32>
    %cst_9 = arith.constant 0.000000e+00 : f32
    %37 = vector.broadcast %cst_9 : f32 to vector<8x32xf32>
    %38 = arith.maximumf %3, %37 : vector<8x32xf32>
    %39 = tpu.concatenate %38, %36 in 0 : vector<8x32xf32>, vector<88x32xf32> -> vector<96x32xf32>
    %c0_10 = arith.constant 0 : index
    %c0_11 = arith.constant 0 : index
    %40 = vector.load %arg4[%c0_10, %c0_11] : memref<128x128xf32, #tpu.memory_space<vmem>>, vector<32x32xf32>
    %cst_12 = arith.constant dense<0.000000e+00> : vector<96x32xf32>
    %41 = tpu.matmul %39, %40, %cst_12 {dimension_numbers = #tpu.dot_dimension_numbers<[1], [0], [0], [1], [0, 0, 1, 1], [], []>} : vector<96x32xf32>, vector<32x32xf32>, vector<96x32xf32> -> vector<96x32xf32>
    %cst_13 = arith.constant 0.000000e+00 : f32
    %42 = vector.broadcast %cst_13 : f32 to vector<96x32xf32>
    %43 = arith.maximumf %41, %42 : vector<96x32xf32>
    %c32 = arith.constant 32 : index
    %c0_14 = arith.constant 0 : index
    %44 = vector.load %arg4[%c32, %c0_14] : memref<128x128xf32, #tpu.memory_space<vmem>>, vector<32x32xf32>
    %cst_15 = arith.constant dense<0.000000e+00> : vector<96x32xf32>
    %45 = tpu.matmul %43, %44, %cst_15 {dimension_numbers = #tpu.dot_dimension_numbers<[1], [0], [0], [1], [0, 0, 1, 1], [], []>} : vector<96x32xf32>, vector<32x32xf32>, vector<96x32xf32> -> vector<96x32xf32>
    %cst_16 = arith.constant 0.000000e+00 : f32
    %46 = vector.broadcast %cst_16 : f32 to vector<96x32xf32>
    %47 = arith.maximumf %45, %46 : vector<96x32xf32>
    %c64 = arith.constant 64 : index
    %c0_17 = arith.constant 0 : index
    %48 = vector.load %arg4[%c64, %c0_17] : memref<128x128xf32, #tpu.memory_space<vmem>>, vector<32x32xf32>
    %cst_18 = arith.constant dense<0.000000e+00> : vector<96x32xf32>
    %49 = tpu.matmul %47, %48, %cst_18 {dimension_numbers = #tpu.dot_dimension_numbers<[1], [0], [0], [1], [0, 0, 1, 1], [], []>} : vector<96x32xf32>, vector<32x32xf32>, vector<96x32xf32> -> vector<96x32xf32>
    %cst_19 = arith.constant 0.000000e+00 : f32
    %50 = vector.broadcast %cst_19 : f32 to vector<96x32xf32>
    %51 = arith.maximumf %49, %50 : vector<96x32xf32>
    %c96 = arith.constant 96 : index
    %c0_20 = arith.constant 0 : index
    %52 = vector.load %arg4[%c96, %c0_20] : memref<128x128xf32, #tpu.memory_space<vmem>>, vector<32x128xf32>
    %cst_21 = arith.constant dense<0.000000e+00> : vector<96x128xf32>
    %53 = tpu.matmul %51, %52, %cst_21 {dimension_numbers = #tpu.dot_dimension_numbers<[1], [0], [0], [1], [0, 0, 1, 1], [], []>} : vector<96x32xf32>, vector<32x128xf32>, vector<96x128xf32> -> vector<96x128xf32>
    %54 = vector.extract_strided_slice %53 {offsets = [0, 0], sizes = [8, 128], strides = [1, 1]} : vector<96x128xf32> to vector<8x128xf32>
    %c0_22 = arith.constant 0 : index
    %c0_23 = arith.constant 0 : index
    %55 = vector.load %arg5[%c0_22, %c0_23] : memref<8x1536xf32, #tpu.memory_space<vmem>>, vector<8x128xf32>
    tpu.vector_store %arg5[%c0_22, %c0_23], %54 {strides = array<i32>} : memref<8x1536xf32, #tpu.memory_space<vmem>>, vector<8x128xf32>,
    %56 = vector.extract_strided_slice %53 {offsets = [8, 0], sizes = [8, 128], strides = [1, 1]} : vector<96x128xf32> to vector<8x128xf32>
    %c0_24 = arith.constant 0 : index
    %c128 = arith.constant 128 : index
    %57 = vector.load %arg5[%c0_24, %c128] : memref<8x1536xf32, #tpu.memory_space<vmem>>, vector<8x128xf32>
    tpu.vector_store %arg5[%c0_24, %c128], %56 {strides = array<i32>} : memref<8x1536xf32, #tpu.memory_space<vmem>>, vector<8x128xf32>,
    %58 = vector.extract_strided_slice %53 {offsets = [16, 0], sizes = [8, 128], strides = [1, 1]} : vector<96x128xf32> to vector<8x128xf32>
    %c0_25 = arith.constant 0 : index
    %c256 = arith.constant 256 : index
    %59 = vector.load %arg5[%c0_25, %c256] : memref<8x1536xf32, #tpu.memory_space<vmem>>, vector<8x128xf32>
    tpu.vector_store %arg5[%c0_25, %c256], %58 {strides = array<i32>} : memref<8x1536xf32, #tpu.memory_space<vmem>>, vector<8x128xf32>,
    %60 = vector.extract_strided_slice %53 {offsets = [24, 0], sizes = [8, 128], strides = [1, 1]} : vector<96x128xf32> to vector<8x128xf32>
    %c0_26 = arith.constant 0 : index
    %c384 = arith.constant 384 : index
    %61 = vector.load %arg5[%c0_26, %c384] : memref<8x1536xf32, #tpu.memory_space<vmem>>, vector<8x128xf32>
    tpu.vector_store %arg5[%c0_26, %c384], %60 {strides = array<i32>} : memref<8x1536xf32, #tpu.memory_space<vmem>>, vector<8x128xf32>,
    %62 = vector.extract_strided_slice %53 {offsets = [32, 0], sizes = [8, 128], strides = [1, 1]} : vector<96x128xf32> to vector<8x128xf32>
    %c0_27 = arith.constant 0 : index
    %c512 = arith.constant 512 : index
    %63 = vector.load %arg5[%c0_27, %c512] : memref<8x1536xf32, #tpu.memory_space<vmem>>, vector<8x128xf32>
    tpu.vector_store %arg5[%c0_27, %c512], %62 {strides = array<i32>} : memref<8x1536xf32, #tpu.memory_space<vmem>>, vector<8x128xf32>,
    %64 = vector.extract_strided_slice %53 {offsets = [40, 0], sizes = [8, 128], strides = [1, 1]} : vector<96x128xf32> to vector<8x128xf32>
    %c0_28 = arith.constant 0 : index
    %c640 = arith.constant 640 : index
    %65 = vector.load %arg5[%c0_28, %c640] : memref<8x1536xf32, #tpu.memory_space<vmem>>, vector<8x128xf32>
    tpu.vector_store %arg5[%c0_28, %c640], %64 {strides = array<i32>} : memref<8x1536xf32, #tpu.memory_space<vmem>>, vector<8x128xf32>,
    %66 = vector.extract_strided_slice %53 {offsets = [48, 0], sizes = [8, 128], strides = [1, 1]} : vector<96x128xf32> to vector<8x128xf32>
    %c0_29 = arith.constant 0 : index
    %c768 = arith.constant 768 : index
    %67 = vector.load %arg5[%c0_29, %c768] : memref<8x1536xf32, #tpu.memory_space<vmem>>, vector<8x128xf32>
    tpu.vector_store %arg5[%c0_29, %c768], %66 {strides = array<i32>} : memref<8x1536xf32, #tpu.memory_space<vmem>>, vector<8x128xf32>,
    %68 = vector.extract_strided_slice %53 {offsets = [56, 0], sizes = [8, 128], strides = [1, 1]} : vector<96x128xf32> to vector<8x128xf32>
    %c0_30 = arith.constant 0 : index
    %c896 = arith.constant 896 : index
    %69 = vector.load %arg5[%c0_30, %c896] : memref<8x1536xf32, #tpu.memory_space<vmem>>, vector<8x128xf32>
    tpu.vector_store %arg5[%c0_30, %c896], %68 {strides = array<i32>} : memref<8x1536xf32, #tpu.memory_space<vmem>>, vector<8x128xf32>,
    %70 = vector.extract_strided_slice %53 {offsets = [64, 0], sizes = [8, 128], strides = [1, 1]} : vector<96x128xf32> to vector<8x128xf32>
    %c0_31 = arith.constant 0 : index
    %c1024 = arith.constant 1024 : index
    %71 = vector.load %arg5[%c0_31, %c1024] : memref<8x1536xf32, #tpu.memory_space<vmem>>, vector<8x128xf32>
    tpu.vector_store %arg5[%c0_31, %c1024], %70 {strides = array<i32>} : memref<8x1536xf32, #tpu.memory_space<vmem>>, vector<8x128xf32>,
    %72 = vector.extract_strided_slice %53 {offsets = [72, 0], sizes = [8, 128], strides = [1, 1]} : vector<96x128xf32> to vector<8x128xf32>
    %c0_32 = arith.constant 0 : index
    %c1152 = arith.constant 1152 : index
    %73 = vector.load %arg5[%c0_32, %c1152] : memref<8x1536xf32, #tpu.memory_space<vmem>>, vector<8x128xf32>
    tpu.vector_store %arg5[%c0_32, %c1152], %72 {strides = array<i32>} : memref<8x1536xf32, #tpu.memory_space<vmem>>, vector<8x128xf32>,
    %74 = vector.extract_strided_slice %53 {offsets = [80, 0], sizes = [8, 128], strides = [1, 1]} : vector<96x128xf32> to vector<8x128xf32>
    %c0_33 = arith.constant 0 : index
    %c1280 = arith.constant 1280 : index
    %75 = vector.load %arg5[%c0_33, %c1280] : memref<8x1536xf32, #tpu.memory_space<vmem>>, vector<8x128xf32>
    tpu.vector_store %arg5[%c0_33, %c1280], %74 {strides = array<i32>} : memref<8x1536xf32, #tpu.memory_space<vmem>>, vector<8x128xf32>,
    %76 = vector.extract_strided_slice %53 {offsets = [88, 0], sizes = [8, 128], strides = [1, 1]} : vector<96x128xf32> to vector<8x128xf32>
    %c0_34 = arith.constant 0 : index
    %c1408 = arith.constant 1408 : index
    %77 = vector.load %arg5[%c0_34, %c1408] : memref<8x1536xf32, #tpu.memory_space<vmem>>, vector<8x128xf32>
    tpu.vector_store %arg5[%c0_34, %c1408], %76 {strides = array<i32>} : memref<8x1536xf32, #tpu.memory_space<vmem>>, vector<8x128xf32>,
    return
  }
  func.func @transform_0(%arg0: i32) -> (i32, i32) {
    %c0_i32 = arith.constant 0 : i32
    %c0_i32_0 = arith.constant 0 : i32
    return %arg0, %c0_i32 : i32, i32
  }
  func.func @transform_1(%arg0: i32) -> (i32, i32) {
    %c0_i32 = arith.constant 0 : i32
    %c0_i32_0 = arith.constant 0 : i32
    %c0_i32_1 = arith.constant 0 : i32
    return %c0_i32, %c0_i32_0 : i32, i32
  }
  func.func @transform_2(%arg0: i32) -> (i32, i32, i32) {
    %c0_i32 = arith.constant 0 : i32
    %c0_i32_0 = arith.constant 0 : i32
    %c0_i32_1 = arith.constant 0 : i32
    %c0_i32_2 = arith.constant 0 : i32
    return %c0_i32, %c0_i32_0, %c0_i32_1 : i32, i32, i32
  }
  func.func @transform_3(%arg0: i32) -> (i32, i32) {
    %c0_i32 = arith.constant 0 : i32
    %c0_i32_0 = arith.constant 0 : i32
    %c0_i32_1 = arith.constant 0 : i32
    return %c0_i32, %c0_i32_0 : i32, i32
  }
  func.func @transform_4(%arg0: i32) -> (i32, i32) {
    %c0_i32 = arith.constant 0 : i32
    %c0_i32_0 = arith.constant 0 : i32
    return %arg0, %c0_i32 : i32, i32
  }
}

</mosaic_0001>

<llo_original>
// kernel: tab_neutral_ad_forward.1
$region0: #{tab_neutral_ad_forward.1}
  #allocation0 [shape = 'u32[]', space=smem, size = 0x4, offset = 0x4, fixed_abs, tag = 'smem constant byte address 0x4 - core index']
  #allocation1 [shape = 'u32[72,128]{1,0:T(1,128)}', space=vmem, size = 0x9000, scoped, tag = 'internal scratch']
  %s0 = inlined_call_operand.hbm [shape: f32[8,16], index: 0, kind: input, shape index: {}]
  %s1 = inlined_call_operand.hbm [shape: f32[16,384], index: 1, kind: input, shape index: {}]
  %s2 = inlined_call_operand.hbm [shape: f32[11,32,32], index: 2, kind: input, shape index: {}]
  %s3 = inlined_call_operand.hbm [shape: f32[128,128], index: 3, kind: input, shape index: {}]
  %s4 = inlined_call_operand.hbm [shape: f32[8,1536], index: 4, kind: output, shape index: {}]
  %s5 = sld [smem:[#allocation0]]
  $region42: #{tab_neutral_ad_forward.1} parent=0
    _
  %s7 = ssub.s32 1, %s5
  %s8 = scalar_select 0, %s7, %s5
  $region1: #{tab_neutral_ad_forward.1} parent=0
    #allocation2 [shape = 'u8[4096]{0}', space=vmem, size = 0x1000, scoped, tag = 'input window, operand 0, single buffered']
    #allocation3 [shape = 's32[1]{0}', space=sflag, size = 0x4, scoped, tag = 'scoped memory for tab_neutral_ad_forward.1']
    #allocation4 [shape = 's32[1]{0}', space=sflag, size = 0x4, scoped, tag = 'scoped memory for tab_neutral_ad_forward.1']
    #allocation5 [shape = 'u8[24576]{0}', space=vmem, size = 0x6000, scoped, tag = 'input window, operand 1, single buffered']
    #allocation6 [shape = 's32[1]{0}', space=sflag, size = 0x4, scoped, tag = 'scoped memory for tab_neutral_ad_forward.1']
    #allocation7 [shape = 'u8[180224]{0}', space=vmem, size = 0x2c000, scoped, tag = 'input window, operand 2, single buffered']
    #allocation8 [shape = 'u8[65536]{0}', space=vmem, size = 0x10000, scoped, tag = 'input window, operand 3, single buffered']
    #allocation9 [shape = 's32[1]{0}', space=sflag, size = 0x4, scoped, tag = 'scoped memory for tab_neutral_ad_forward.1']
    #allocation10 [shape = 'u8[49152]{0}', space=vmem, size = 0xc000, scoped, tag = 'output window, operand 0, single buffered']
    %9 = vsyncpa [#allocation3], 0
    %10 = vsyncpa [#allocation6], 0
    %11 = vsyncpa [#allocation9], 0
    %12 = vsyncpa [#allocation4], 0
    // Predicated region
    $region2: #{tab_neutral_ad_forward.1} parent=1 // pred_check
      _
    $region3: #{tab_neutral_ad_forward.1} parent=1 // pred_check_branch
      %14 = sbr.rel (0) target = $region5
    $region4: #{tab_neutral_ad_forward.1} parent=1 // pred_region
      %16 = vsyncadd [#allocation3], 0
      %s18 = sshll.u32 %s0, 4
      %s19 = int_to_ptr.hbm [resolvable:$true] %s18
      %s20 = sshll.u32 [#allocation2], 4
      %s21 = int_to_ptr.vmem [resolvable:$true] %s20
      %23 = dma.hbm_to_vmem [thread:$0]  %s19, 128, %s21, [#allocation3]
    $region5: #{tab_neutral_ad_forward.1} parent=1 // pred_fallthru
      _
    // Predicated region
    $region6: #{tab_neutral_ad_forward.1} parent=1 // pred_check
      _
    $region7: #{tab_neutral_ad_forward.1} parent=1 // pred_check_branch
      %25 = sbr.rel (0) target = $region9
    $region8: #{tab_neutral_ad_forward.1} parent=1 // pred_region
      %27 = vsyncadd [#allocation6], 0
      %s28 = sshll.u32 %s1, 4
      %s29 = int_to_ptr.hbm [resolvable:$true] %s28
      %s30 = sshll.u32 [#allocation5], 4
      %s31 = int_to_ptr.vmem [resolvable:$true] %s30
      %36 = dma.hbm_to_vmem [thread:$0]  %s29, 768, %s31, [#allocation6], 384, 384, 24
    $region9: #{tab_neutral_ad_forward.1} parent=1 // pred_fallthru
      _
    // Predicated region
    $region10: #{tab_neutral_ad_forward.1} parent=1 // pred_check
      _
    $region11: #{tab_neutral_ad_forward.1} parent=1 // pred_check_branch
      %38 = sbr.rel (0) target = $region13
    $region12: #{tab_neutral_ad_forward.1} parent=1 // pred_region
      %40 = vsyncadd [#allocation6], 0
      %s41 = sshll.u32 %s2, 4
      %s42 = int_to_ptr.hbm [resolvable:$true] %s41
      %s43 = sshll.u32 [#allocation7], 4
      %s44 = int_to_ptr.vmem [resolvable:$true] %s43
      %49 = dma.hbm_to_vmem [thread:$0]  %s42, 5632, %s44, [#allocation6], 128, 128, 8
    $region13: #{tab_neutral_ad_forward.1} parent=1 // pred_fallthru
      _
    // Predicated region
    $region14: #{tab_neutral_ad_forward.1} parent=1 // pred_check
      _
    $region15: #{tab_neutral_ad_forward.1} parent=1 // pred_check_branch
      %51 = sbr.rel (0) target = $region17
    $region16: #{tab_neutral_ad_forward.1} parent=1 // pred_region
      %53 = vsyncadd [#allocation9], 0
      %s54 = sshll.u32 %s3, 4
      %s55 = int_to_ptr.hbm [resolvable:$true] %s54
      %s56 = sshll.u32 [#allocation8], 4
      %s57 = int_to_ptr.vmem [resolvable:$true] %s56
      %62 = dma.hbm_to_vmem [thread:$0]  %s55, 2048, %s57, [#allocation9], 128, 128, 8
    $region17: #{tab_neutral_ad_forward.1} parent=1 // pred_fallthru
      _
    // Predicated region
    $region18: #{tab_neutral_ad_forward.1} parent=1 // pred_check
      _
    $region19: #{tab_neutral_ad_forward.1} parent=1 // pred_check_branch
      %64 = sbr.rel (0) target = $region21
    $region20: #{tab_neutral_ad_forward.1} parent=1 // pred_region
      %66 = dma.done [#allocation3], 128
    $region21: #{tab_neutral_ad_forward.1} parent=1 // pred_fallthru
      _
    // Predicated region
    $region22: #{tab_neutral_ad_forward.1} parent=1 // pred_check
      _
    $region23: #{tab_neutral_ad_forward.1} parent=1 // pred_check_branch
      %68 = sbr.rel (0) target = $region25
    $region24: #{tab_neutral_ad_forward.1} parent=1 // pred_region
      %70 = dma.done [#allocation6], 768
    $region25: #{tab_neutral_ad_forward.1} parent=1 // pred_fallthru
      _
    // Predicated region
    $region26: #{tab_neutral_ad_forward.1} parent=1 // pred_check
      _
    $region27: #{tab_neutral_ad_forward.1} parent=1 // pred_check_branch
      %72 = sbr.rel (0) target = $region29
    $region28: #{tab_neutral_ad_forward.1} parent=1 // pred_region
      %74 = dma.done [#allocation6], 5632
    $region29: #{tab_neutral_ad_forward.1} parent=1 // pred_fallthru
      _
    // Predicated region
    $region30: #{tab_neutral_ad_forward.1} parent=1 // pred_check
      _
    $region31: #{tab_neutral_ad_forward.1} parent=1 // pred_check_branch
      %76 = sbr.rel (0) target = $region33
    $region32: #{tab_neutral_ad_forward.1} parent=1 // pred_region
      %78 = dma.done [#allocation9], 2048
    $region33: #{tab_neutral_ad_forward.1} parent=1 // pred_fallthru
      _
    %v79 = vld [vmem:[#allocation2] sm:$0xff]
    %v80 = vld [vmem:[#allocation5] sm:$0xff]
    %v81 = vld [vmem:[#allocation5 + $0x8] sm:$0xff]
    %v82 = vld [vmem:[#allocation5 + $0x10] sm:$0xff]
    %v83 = vld [vmem:[#allocation5 + $0x18] sm:$0xff]
    %v84 = vld [vmem:[#allocation5 + $0x20] sm:$0xff]
    %v85 = vld [vmem:[#allocation5 + $0x28] sm:$0xff]
    %vm86 = vcmask 130048
    %v88 = vsel %vm86, %v79, 0
    %90 = vmatpush.msra.mxu0 0.0
    %91 = vmatpush.msra.mxu0 0.0
    %92 = vmatpush.msra.mxu0 0.0
    %93 = vmatpush.msra.mxu0 0.0
    %94 = vmatpush.msra.mxu0 0.0
    %95 = vmatpush.msra.mxu0 0.0
    %96 = vmatpush.msra.mxu0 0.0
    %97 = vmatpush.msra.mxu0 0.0
    %98 = vmatpush.msra.mxu0 0.0
    %99 = vmatpush.msra.mxu0 0.0
    %100 = vmatpush.msra.mxu0 0.0
    %101 = vmatpush.msra.mxu0 0.0
    %102 = vmatpush.msra.mxu0 0.0
    %103 = vmatpush.msra.mxu0 0.0
    %104 = vmatpush.msra.mxu0 %v83
    %105 = vmatpush.msra.mxu0 %v80
    %106 = vmatmul.f32.gmra.mxu0 %v88
    %v107 = vpop.f32.mrf.mxu0
    %v108 = vadd.f32 0.0, %v107
    %109 = vdwg.mxu0
    %110 = vmatpush.msra.mxu0 0.0
    %111 = vmatpush.msra.mxu0 0.0
    %112 = vmatpush.msra.mxu0 0.0
    %113 = vmatpush.msra.mxu0 0.0
    %114 = vmatpush.msra.mxu0 0.0
    %115 = vmatpush.msra.mxu0 0.0
    %116 = vmatpush.msra.mxu0 0.0
    %117 = vmatpush.msra.mxu0 0.0
    %118 = vmatpush.msra.mxu0 0.0
    %119 = vmatpush.msra.mxu0 0.0
    %120 = vmatpush.msra.mxu0 0.0
    %121 = vmatpush.msra.mxu0 0.0
    %122 = vmatpush.msra.mxu0 0.0
    %123 = vmatpush.msra.mxu0 0.0
    %124 = vmatpush.msra.mxu0 %v84
    %125 = vmatpush.msra.mxu0 %v81
    %126 = vmatmul.f32.gmra.mxu0 %v88
    %v127 = vpop.f32.mrf.mxu0
    %v128 = vadd.f32 0.0, %v127
    %129 = vdwg.mxu0
    %130 = vmatpush.msra.mxu0 0.0
    %131 = vmatpush.msra.mxu0 0.0
    %132 = vmatpush.msra.mxu0 0.0
    %133 = vmatpush.msra.mxu0 0.0
    %134 = vmatpush.msra.mxu0 0.0
    %135 = vmatpush.msra.mxu0 0.0
    %136 = vmatpush.msra.mxu0 0.0
    %137 = vmatpush.msra.mxu0 0.0
    %138 = vmatpush.msra.mxu0 0.0
    %139 = vmatpush.msra.mxu0 0.0
    %140 = vmatpush.msra.mxu0 0.0
    %141 = vmatpush.msra.mxu0 0.0
    %142 = vmatpush.msra.mxu0 0.0
    %143 = vmatpush.msra.mxu0 0.0
    %144 = vmatpush.msra.mxu0 %v85
    %145 = vmatpush.msra.mxu0 %v82
    %146 = vmatmul.f32.gmra.mxu0 %v88
    %v147 = vpop.f32.mrf.mxu0
    %v148 = vadd.f32 0.0, %v147
    %149 = vdwg.mxu0
    %151 = vrot.lane.b32.xlu0 %v108, 96
    %v152 = vpop.permute.xlu0 %151
    %154 = vrot.lane.b32.xlu0 %v108, 64
    %v155 = vpop.permute.xlu0 %154
    %157 = vrot.lane.b32.xlu0 %v108, 32
    %v158 = vpop.permute.xlu0 %157
    %161 = vrot.lane.b32.xlu0 %v128, 96
    %v162 = vpop.permute.xlu0 %161
    %164 = vrot.lane.b32.xlu0 %v128, 64
    %v165 = vpop.permute.xlu0 %164
    %167 = vrot.lane.b32.xlu0 %v128, 32
    %v168 = vpop.permute.xlu0 %167
    %171 = vrot.lane.b32.xlu0 %v148, 96
    %v172 = vpop.permute.xlu0 %171
    %174 = vrot.lane.b32.xlu0 %v148, 64
    %v175 = vpop.permute.xlu0 %174
    %v177 = vmax.f32 %v108, 0.0
    %v178 = vmax.f32 %v152, 0.0
    %v179 = vmax.f32 %v155, 0.0
    %v180 = vmax.f32 %v158, 0.0
    %v181 = vmax.f32 %v128, 0.0
    %v182 = vmax.f32 %v162, 0.0
    %v183 = vmax.f32 %v165, 0.0
    %v184 = vmax.f32 %v168, 0.0
    %v185 = vmax.f32 %v148, 0.0
    %v186 = vmax.f32 %v172, 0.0
    %v187 = vmax.f32 %v175, 0.0
    %v188 = vld [vmem:[#allocation7] sm:$0xff]
    %v189 = vld [vmem:[#allocation7 + $0x8] sm:$0xff]
    %v190 = vld [vmem:[#allocation7 + $0x10] sm:$0xff]
    %v191 = vld [vmem:[#allocation7 + $0x18] sm:$0xff]
    %v192 = vld [vmem:[#allocation7 + $0x20] sm:$0xff]
    %v193 = vld [vmem:[#allocation7 + $0x28] sm:$0xff]
    %v194 = vld [vmem:[#allocation7 + $0x30] sm:$0xff]
    %v195 = vld [vmem:[#allocation7 + $0x38] sm:$0xff]
    %v196 = vld [vmem:[#allocation7 + $0x40] sm:$0xff]
    %v197 = vld [vmem:[#allocation7 + $0x48] sm:$0xff]
    %v198 = vld [vmem:[#allocation7 + $0x50] sm:$0xff]
    %v199 = vld [vmem:[#allocation7 + $0x58] sm:$0xff]
    %v200 = vld [vmem:[#allocation7 + $0x60] sm:$0xff]
    %v201 = vld [vmem:[#allocation7 + $0x68] sm:$0xff]
    %v202 = vld [vmem:[#allocation7 + $0x70] sm:$0xff]
    %v203 = vld [vmem:[#allocation7 + $0x78] sm:$0xff]
    %v204 = vld [vmem:[#allocation7 + $0x80] sm:$0xff]
    %v205 = vld [vmem:[#allocation7 + $0x88] sm:$0xff]
    %v206 = vld [vmem:[#allocation7 + $0x90] sm:$0xff]
    %v207 = vld [vmem:[#allocation7 + $0x98] sm:$0xff]
    %v208 = vld [vmem:[#allocation7 + $0xa0] sm:$0xff]
    %v209 = vld [vmem:[#allocation7 + $0xa8] sm:$0xff]
    %v210 = vld [vmem:[#allocation7 + $0xb0] sm:$0xff]
    %v211 = vld [vmem:[#allocation7 + $0xb8] sm:$0xff]
    %v212 = vld [vmem:[#allocation7 + $0xc0] sm:$0xff]
    %v213 = vld [vmem:[#allocation7 + $0xc8] sm:$0xff]
    %v214 = vld [vmem:[#allocation7 + $0xd0] sm:$0xff]
    %v215 = vld [vmem:[#allocation7 + $0xd8] sm:$0xff]
    %v216 = vld [vmem:[#allocation7 + $0xe0] sm:$0xff]
    %v217 = vld [vmem:[#allocation7 + $0xe8] sm:$0xff]
    %v218 = vld [vmem:[#allocation7 + $0xf0] sm:$0xff]
    %v219 = vld [vmem:[#allocation7 + $0xf8] sm:$0xff]
    %v220 = vld [vmem:[#allocation7 + $0x100] sm:$0xff]
    %v221 = vld [vmem:[#allocation7 + $0x108] sm:$0xff]
    %v222 = vld [vmem:[#allocation7 + $0x110] sm:$0xff]
    %v223 = vld [vmem:[#allocation7 + $0x118] sm:$0xff]
    %v224 = vld [vmem:[#allocation7 + $0x120] sm:$0xff]
    %v225 = vld [vmem:[#allocation7 + $0x128] sm:$0xff]
    %v226 = vld [vmem:[#allocation7 + $0x130] sm:$0xff]
    %v227 = vld [vmem:[#allocation7 + $0x138] sm:$0xff]
    %v228 = vld [vmem:[#allocation7 + $0x140] sm:$0xff]
    %v229 = vld [vmem:[#allocation7 + $0x148] sm:$0xff]
    %v230 = vld [vmem:[#allocation7 + $0x150] sm:$0xff]
    %v231 = vld [vmem:[#allocation7 + $0x158] sm:$0xff]
    %232 = vrot.lane.b32.xlu0 %v148, 32
    %v233 = vpop.permute.xlu0 %232
    %vm235 = vcmask 261120
    %v237 = vsel %vm235, %v177, 0
    %239 = vmatpush.msra.mxu0 0.0
    %240 = vmatpush.msra.mxu0 0.0
    %241 = vmatpush.msra.mxu0 0.0
    %242 = vmatpush.msra.mxu0 0.0
    %243 = vmatpush.msra.mxu0 0.0
    %244 = vmatpush.msra.mxu0 0.0
    %245 = vmatpush.msra.mxu0 0.0
    %246 = vmatpush.msra.mxu0 0.0
    %247 = vmatpush.msra.mxu0 0.0
    %248 = vmatpush.msra.mxu0 0.0
    %249 = vmatpush.msra.mxu0 0.0
    %250 = vmatpush.msra.mxu0 0.0
    %251 = vmatpush.msra.mxu0 %v191
    %252 = vmatpush.msra.mxu0 %v190
    %253 = vmatpush.msra.mxu0 %v189
    %254 = vmatpush.msra.mxu0 %v188
    %255 = vmatmul.f32.gmra.mxu0 %v237
    %v256 = vpop.f32.mrf.mxu0
    %v257 = vadd.f32 %v233, %v256
    %258 = vdwg.mxu0
    %v260 = vsel %vm235, %v178, 0
    %262 = vmatpush.msra.mxu0 0.0
    %263 = vmatpush.msra.mxu0 0.0
    %264 = vmatpush.msra.mxu0 0.0
    %265 = vmatpush.msra.mxu0 0.0
    %266 = vmatpush.msra.mxu0 0.0
    %267 = vmatpush.msra.mxu0 0.0
    %268 = vmatpush.msra.mxu0 0.0
    %269 = vmatpush.msra.mxu0 0.0
    %270 = vmatpush.msra.mxu0 0.0
    %271 = vmatpush.msra.mxu0 0.0
    %272 = vmatpush.msra.mxu0 0.0
    %273 = vmatpush.msra.mxu0 0.0
    %274 = vmatpush.msra.mxu0 %v195
    %275 = vmatpush.msra.mxu0 %v194
    %276 = vmatpush.msra.mxu0 %v193
    %277 = vmatpush.msra.mxu0 %v192
    %278 = vmatmul.f32.gmra.mxu0 %v260
    %v279 = vpop.f32.mrf.mxu0
    %v280 = vadd.f32 %v233, %v279
    %281 = vdwg.mxu0
    %v283 = vsel %vm235, %v179, 0
    %285 = vmatpush.msra.mxu0 0.0
    %286 = vmatpush.msra.mxu0 0.0
    %287 = vmatpush.msra.mxu0 0.0
    %288 = vmatpush.msra.mxu0 0.0
    %289 = vmatpush.msra.mxu0 0.0
    %290 = vmatpush.msra.mxu0 0.0
    %291 = vmatpush.msra.mxu0 0.0
    %292 = vmatpush.msra.mxu0 0.0
    %293 = vmatpush.msra.mxu0 0.0
    %294 = vmatpush.msra.mxu0 0.0
    %295 = vmatpush.msra.mxu0 0.0
    %296 = vmatpush.msra.mxu0 0.0
    %297 = vmatpush.msra.mxu0 %v199
    %298 = vmatpush.msra.mxu0 %v198
    %299 = vmatpush.msra.mxu0 %v197
    %300 = vmatpush.msra.mxu0 %v196
    %301 = vmatmul.f32.gmra.mxu0 %v283
    %v302 = vpop.f32.mrf.mxu0
    %v303 = vadd.f32 %v233, %v302
    %304 = vdwg.mxu0
    %v306 = vsel %vm235, %v180, 0
    %308 = vmatpush.msra.mxu0 0.0
    %309 = vmatpush.msra.mxu0 0.0
    %310 = vmatpush.msra.mxu0 0.0
    %311 = vmatpush.msra.mxu0 0.0
    %312 = vmatpush.msra.mxu0 0.0
    %313 = vmatpush.msra.mxu0 0.0
    %314 = vmatpush.msra.mxu0 0.0
    %315 = vmatpush.msra.mxu0 0.0
    %316 = vmatpush.msra.mxu0 0.0
    %317 = vmatpush.msra.mxu0 0.0
    %318 = vmatpush.msra.mxu0 0.0
    %319 = vmatpush.msra.mxu0 0.0
    %320 = vmatpush.msra.mxu0 %v203
    %321 = vmatpush.msra.mxu0 %v202
    %322 = vmatpush.msra.mxu0 %v201
    %323 = vmatpush.msra.mxu0 %v200
    %324 = vmatmul.f32.gmra.mxu0 %v306
    %v325 = vpop.f32.mrf.mxu0
    %v326 = vadd.f32 %v233, %v325
    %327 = vdwg.mxu0
    %v329 = vsel %vm235, %v181, 0
    %331 = vmatpush.msra.mxu0 0.0
    %332 = vmatpush.msra.mxu0 0.0
    %333 = vmatpush.msra.mxu0 0.0
    %334 = vmatpush.msra.mxu0 0.0
    %335 = vmatpush.msra.mxu0 0.0
    %336 = vmatpush.msra.mxu0 0.0
    %337 = vmatpush.msra.mxu0 0.0
    %338 = vmatpush.msra.mxu0 0.0
    %339 = vmatpush.msra.mxu0 0.0
    %340 = vmatpush.msra.mxu0 0.0
    %341 = vmatpush.msra.mxu0 0.0
    %342 = vmatpush.msra.mxu0 0.0
    %343 = vmatpush.msra.mxu0 %v207
    %344 = vmatpush.msra.mxu0 %v206
    %345 = vmatpush.msra.mxu0 %v205
    %346 = vmatpush.msra.mxu0 %v204
    %347 = vmatmul.f32.gmra.mxu0 %v329
    %v348 = vpop.f32.mrf.mxu0
    %v349 = vadd.f32 %v233, %v348
    %350 = vdwg.mxu0
    %v352 = vsel %vm235, %v182, 0
    %354 = vmatpush.msra.mxu0 0.0
    %355 = vmatpush.msra.mxu0 0.0
    %356 = vmatpush.msra.mxu0 0.0
    %357 = vmatpush.msra.mxu0 0.0
    %358 = vmatpush.msra.mxu0 0.0
    %359 = vmatpush.msra.mxu0 0.0
    %360 = vmatpush.msra.mxu0 0.0
    %361 = vmatpush.msra.mxu0 0.0
    %362 = vmatpush.msra.mxu0 0.0
    %363 = vmatpush.msra.mxu0 0.0
    %364 = vmatpush.msra.mxu0 0.0
    %365 = vmatpush.msra.mxu0 0.0
    %366 = vmatpush.msra.mxu0 %v211
    %367 = vmatpush.msra.mxu0 %v210
    %368 = vmatpush.msra.mxu0 %v209
    %369 = vmatpush.msra.mxu0 %v208
    %370 = vmatmul.f32.gmra.mxu0 %v352
    %v371 = vpop.f32.mrf.mxu0
    %v372 = vadd.f32 %v233, %v371
    %373 = vdwg.mxu0
    %v375 = vsel %vm235, %v183, 0
    %377 = vmatpush.msra.mxu0 0.0
    %378 = vmatpush.msra.mxu0 0.0
    %379 = vmatpush.msra.mxu0 0.0
    %380 = vmatpush.msra.mxu0 0.0
    %381 = vmatpush.msra.mxu0 0.0
    %382 = vmatpush.msra.mxu0 0.0
    %383 = vmatpush.msra.mxu0 0.0
    %384 = vmatpush.msra.mxu0 0.0
    %385 = vmatpush.msra.mxu0 0.0
    %386 = vmatpush.msra.mxu0 0.0
    %387 = vmatpush.msra.mxu0 0.0
    %388 = vmatpush.msra.mxu0 0.0
    %389 = vmatpush.msra.mxu0 %v215
    %390 = vmatpush.msra.mxu0 %v214
    %391 = vmatpush.msra.mxu0 %v213
    %392 = vmatpush.msra.mxu0 %v212
    %393 = vmatmul.f32.gmra.mxu0 %v375
    %v394 = vpop.f32.mrf.mxu0
    %v395 = vadd.f32 %v233, %v394
    %396 = vdwg.mxu0
    %v398 = vsel %vm235, %v184, 0
    %400 = vmatpush.msra.mxu0 0.0
    %401 = vmatpush.msra.mxu0 0.0
    %402 = vmatpush.msra.mxu0 0.0
    %403 = vmatpush.msra.mxu0 0.0
    %404 = vmatpush.msra.mxu0 0.0
    %405 = vmatpush.msra.mxu0 0.0
    %406 = vmatpush.msra.mxu0 0.0
    %407 = vmatpush.msra.mxu0 0.0
    %408 = vmatpush.msra.mxu0 0.0
    %409 = vmatpush.msra.mxu0 0.0
    %410 = vmatpush.msra.mxu0 0.0
    %411 = vmatpush.msra.mxu0 0.0
    %412 = vmatpush.msra.mxu0 %v219
    %413 = vmatpush.msra.mxu0 %v218
    %414 = vmatpush.msra.mxu0 %v217
    %415 = vmatpush.msra.mxu0 %v216
    %416 = vmatmul.f32.gmra.mxu0 %v398
    %v417 = vpop.f32.mrf.mxu0
    %v418 = vadd.f32 %v233, %v417
    %419 = vdwg.mxu0
    %v421 = vsel %vm235, %v185, 0
    %423 = vmatpush.msra.mxu0 0.0
    %424 = vmatpush.msra.mxu0 0.0
    %425 = vmatpush.msra.mxu0 0.0
    %426 = vmatpush.msra.mxu0 0.0
    %427 = vmatpush.msra.mxu0 0.0
    %428 = vmatpush.msra.mxu0 0.0
    %429 = vmatpush.msra.mxu0 0.0
    %430 = vmatpush.msra.mxu0 0.0
    %431 = vmatpush.msra.mxu0 0.0
    %432 = vmatpush.msra.mxu0 0.0
    %433 = vmatpush.msra.mxu0 0.0
    %434 = vmatpush.msra.mxu0 0.0
    %435 = vmatpush.msra.mxu0 %v223
    %436 = vmatpush.msra.mxu0 %v222
    %437 = vmatpush.msra.mxu0 %v221
    %438 = vmatpush.msra.mxu0 %v220
    %439 = vmatmul.f32.gmra.mxu0 %v421
    %v440 = vpop.f32.mrf.mxu0
    %v441 = vadd.f32 %v233, %v440
    %442 = vdwg.mxu0
    %v444 = vsel %vm235, %v186, 0
    %446 = vmatpush.msra.mxu0 0.0
    %447 = vmatpush.msra.mxu0 0.0
    %448 = vmatpush.msra.mxu0 0.0
    %449 = vmatpush.msra.mxu0 0.0
    %450 = vmatpush.msra.mxu0 0.0
    %451 = vmatpush.msra.mxu0 0.0
    %452 = vmatpush.msra.mxu0 0.0
    %453 = vmatpush.msra.mxu0 0.0
    %454 = vmatpush.msra.mxu0 0.0
    %455 = vmatpush.msra.mxu0 0.0
    %456 = vmatpush.msra.mxu0 0.0
    %457 = vmatpush.msra.mxu0 0.0
    %458 = vmatpush.msra.mxu0 %v227
    %459 = vmatpush.msra.mxu0 %v226
    %460 = vmatpush.msra.mxu0 %v225
    %461 = vmatpush.msra.mxu0 %v224
    %462 = vmatmul.f32.gmra.mxu0 %v444
    %v463 = vpop.f32.mrf.mxu0
    %v464 = vadd.f32 %v233, %v463
    %465 = vdwg.mxu0
    %v467 = vsel %vm235, %v187, 0
    %469 = vmatpush.msra.mxu0 0.0
    %470 = vmatpush.msra.mxu0 0.0
    %471 = vmatpush.msra.mxu0 0.0
    %472 = vmatpush.msra.mxu0 0.0
    %473 = vmatpush.msra.mxu0 0.0
    %474 = vmatpush.msra.mxu0 0.0
    %475 = vmatpush.msra.mxu0 0.0
    %476 = vmatpush.msra.mxu0 0.0
    %477 = vmatpush.msra.mxu0 0.0
    %478 = vmatpush.msra.mxu0 0.0
    %479 = vmatpush.msra.mxu0 0.0
    %480 = vmatpush.msra.mxu0 0.0
    %481 = vmatpush.msra.mxu0 %v231
    %482 = vmatpush.msra.mxu0 %v230
    %483 = vmatpush.msra.mxu0 %v229
    %484 = vmatpush.msra.mxu0 %v228
    %485 = vmatmul.f32.gmra.mxu0 %v467
    %v486 = vpop.f32.mrf.mxu0
    %v487 = vadd.f32 %v233, %v486
    %488 = vdwg.mxu0
    %v489 = vmax.f32 %v257, 0.0
    %v490 = vmax.f32 %v280, 0.0
    %v491 = vmax.f32 %v303, 0.0
    %v492 = vmax.f32 %v326, 0.0
    %v493 = vmax.f32 %v349, 0.0
    %v494 = vmax.f32 %v372, 0.0
    %v495 = vmax.f32 %v395, 0.0
    %v496 = vmax.f32 %v418, 0.0
    %v497 = vmax.f32 %v441, 0.0
    %v498 = vmax.f32 %v464, 0.0
    %v499 = vmax.f32 %v487, 0.0
    %511 = vrot.lane.b32.xlu0 %v489, 96
    %v512 = vpop.permute.xlu0 %511
    %513 = vrot.lane.b32.xlu0 %v490, 96
    %v514 = vpop.permute.xlu0 %513
    %515 = vrot.lane.b32.xlu0 %v491, 96
    %v516 = vpop.permute.xlu0 %515
    %517 = vrot.lane.b32.xlu0 %v492, 96
    %v518 = vpop.permute.xlu0 %517
    %519 = vrot.lane.b32.xlu0 %v493, 96
    %v520 = vpop.permute.xlu0 %519
    %521 = vrot.lane.b32.xlu0 %v494, 96
    %v522 = vpop.permute.xlu0 %521
    %523 = vrot.lane.b32.xlu0 %v495, 96
    %v524 = vpop.permute.xlu0 %523
    %525 = vrot.lane.b32.xlu0 %v496, 96
    %v526 = vpop.permute.xlu0 %525
    %527 = vrot.lane.b32.xlu0 %v497, 96
    %v528 = vpop.permute.xlu0 %527
    %529 = vrot.lane.b32.xlu0 %v498, 96
    %v530 = vpop.permute.xlu0 %529
    %531 = vrot.lane.b32.xlu0 %v499, 96
    %v532 = vpop.permute.xlu0 %531
    %v533 = vld [vmem:[#allocation8] sm:$0xff]
    %v534 = vld [vmem:[#allocation8 + $0x8] sm:$0xff]
    %v535 = vld [vmem:[#allocation8 + $0x10] sm:$0xff]
    %v536 = vld [vmem:[#allocation8 + $0x18] sm:$0xff]
    %537 = vrot.lane.b32.xlu0 %v185, 32
    %v538 = vpop.permute.xlu0 %537
    %539 = vrot.lane.b32.xlu0 %v512, 32
    %v540 = vpop.permute.xlu0 %539
    %541 = vrot.lane.b32.xlu0 %v514, 32
    %v542 = vpop.permute.xlu0 %541
    %543 = vrot.lane.b32.xlu0 %v516, 32
    %v544 = vpop.permute.xlu0 %543
    %545 = vrot.lane.b32.xlu0 %v518, 32
    %v546 = vpop.permute.xlu0 %545
    %547 = vrot.lane.b32.xlu0 %v520, 32
    %v548 = vpop.permute.xlu0 %547
    %549 = vrot.lane.b32.xlu0 %v522, 32
    %v550 = vpop.permute.xlu0 %549
    %551 = vrot.lane.b32.xlu0 %v524, 32
    %v552 = vpop.permute.xlu0 %551
    %553 = vrot.lane.b32.xlu0 %v526, 32
    %v554 = vpop.permute.xlu0 %553
    %555 = vrot.lane.b32.xlu0 %v528, 32
    %v556 = vpop.permute.xlu0 %555
    %557 = vrot.lane.b32.xlu0 %v530, 32
    %v558 = vpop.permute.xlu0 %557
    %559 = vrot.lane.b32.xlu0 %v532, 32
    %v560 = vpop.permute.xlu0 %559
    %v561 = vsel %vm235, %v538, 0
    %v563 = vsel %vm235, %v540, 0
    %v565 = vsel %vm235, %v542, 0
    %v567 = vsel %vm235, %v544, 0
    %v569 = vsel %vm235, %v546, 0
    %v571 = vsel %vm235, %v548, 0
    %v573 = vsel %vm235, %v550, 0
    %v575 = vsel %vm235, %v552, 0
    %v577 = vsel %vm235, %v554, 0
    %v579 = vsel %vm235, %v556, 0
    %v581 = vsel %vm235, %v558, 0
    %v583 = vsel %vm235, %v560, 0
    %585 = vmatpush.msra.mxu0 0.0
    %586 = vmatpush.msra.mxu0 0.0
    %587 = vmatpush.msra.mxu0 0.0
    %588 = vmatpush.msra.mxu0 0.0
    %589 = vmatpush.msra.mxu0 0.0
    %590 = vmatpush.msra.mxu0 0.0
    %591 = vmatpush.msra.mxu0 0.0
    %592 = vmatpush.msra.mxu0 0.0
    %593 = vmatpush.msra.mxu0 0.0
    %594 = vmatpush.msra.mxu0 0.0
    %595 = vmatpush.msra.mxu0 0.0
    %596 = vmatpush.msra.mxu0 0.0
    %597 = vmatpush.msra.mxu0 %v536
    %598 = vmatpush.msra.mxu0 %v535
    %599 = vmatpush.msra.mxu0 %v534
    %600 = vmatpush.msra.mxu0 %v533
    %601 = vmatmul.f32.gmra.mxu0 %v561
    %v602 = vpop.f32.mrf.mxu0
    %v603 = vadd.f32 0.0, %v602
    %604 = vmatmul.f32.gmra.mxu0 %v563
    %v605 = vpop.f32.mrf.mxu0
    %v606 = vadd.f32 0.0, %v605
    %607 = vmatmul.f32.gmra.mxu0 %v565
    %v608 = vpop.f32.mrf.mxu0
    %v609 = vadd.f32 0.0, %v608
    %610 = vmatmul.f32.gmra.mxu0 %v567
    %v611 = vpop.f32.mrf.mxu0
    %v612 = vadd.f32 0.0, %v611
    %613 = vmatmul.f32.gmra.mxu0 %v569
    %v614 = vpop.f32.mrf.mxu0
    %v615 = vadd.f32 0.0, %v614
    %616 = vmatmul.f32.gmra.mxu0 %v571
    %v617 = vpop.f32.mrf.mxu0
    %v618 = vadd.f32 0.0, %v617
    %619 = vmatmul.f32.gmra.mxu0 %v573
    %v620 = vpop.f32.mrf.mxu0
    %v621 = vadd.f32 0.0, %v620
    %622 = vmatmul.f32.gmra.mxu0 %v575
    %v623 = vpop.f32.mrf.mxu0
    %v624 = vadd.f32 0.0, %v623
    %625 = vmatmul.f32.gmra.mxu0 %v577
    %v626 = vpop.f32.mrf.mxu0
    %v627 = vadd.f32 0.0, %v626
    %628 = vmatmul.f32.gmra.mxu0 %v579
    %v629 = vpop.f32.mrf.mxu0
    %v630 = vadd.f32 0.0, %v629
    %631 = vmatmul.f32.gmra.mxu0 %v581
    %v632 = vpop.f32.mrf.mxu0
    %v633 = vadd.f32 0.0, %v632
    %634 = vmatmul.f32.gmra.mxu0 %v583
    %v635 = vpop.f32.mrf.mxu0
    %v636 = vadd.f32 0.0, %v635
    %637 = vdwg.mxu0
    %v638 = vmax.f32 %v603, 0.0
    %v639 = vmax.f32 %v606, 0.0
    %v640 = vmax.f32 %v609, 0.0
    %v641 = vmax.f32 %v612, 0.0
    %v642 = vmax.f32 %v615, 0.0
    %v643 = vmax.f32 %v618, 0.0
    %v644 = vmax.f32 %v621, 0.0
    %v645 = vmax.f32 %v624, 0.0
    %v646 = vmax.f32 %v627, 0.0
    %v647 = vmax.f32 %v630, 0.0
    %v648 = vmax.f32 %v633, 0.0
    %v649 = vmax.f32 %v636, 0.0
    %v650 = vld [vmem:[#allocation8 + $0x20] sm:$0xff]
    %v651 = vld [vmem:[#allocation8 + $0x28] sm:$0xff]
    %v652 = vld [vmem:[#allocation8 + $0x30] sm:$0xff]
    %v653 = vld [vmem:[#allocation8 + $0x38] sm:$0xff]
    %v655 = vsel %vm235, %v638, 0
    %v658 = vsel %vm235, %v639, 0
    %v661 = vsel %vm235, %v640, 0
    %v664 = vsel %vm235, %v641, 0
    %v667 = vsel %vm235, %v642, 0
    %v670 = vsel %vm235, %v643, 0
    %v673 = vsel %vm235, %v644, 0
    %v676 = vsel %vm235, %v645, 0
    %v679 = vsel %vm235, %v646, 0
    %v682 = vsel %vm235, %v647, 0
    %v685 = vsel %vm235, %v648, 0
    %v688 = vsel %vm235, %v649, 0
    %690 = vmatpush.msra.mxu0 0.0
    %691 = vmatpush.msra.mxu0 0.0
    %692 = vmatpush.msra.mxu0 0.0
    %693 = vmatpush.msra.mxu0 0.0
    %694 = vmatpush.msra.mxu0 0.0
    %695 = vmatpush.msra.mxu0 0.0
    %696 = vmatpush.msra.mxu0 0.0
    %697 = vmatpush.msra.mxu0 0.0
    %698 = vmatpush.msra.mxu0 0.0
    %699 = vmatpush.msra.mxu0 0.0
    %700 = vmatpush.msra.mxu0 0.0
    %701 = vmatpush.msra.mxu0 0.0
    %702 = vmatpush.msra.mxu0 %v653
    %703 = vmatpush.msra.mxu0 %v652
    %704 = vmatpush.msra.mxu0 %v651
    %705 = vmatpush.msra.mxu0 %v650
    %706 = vmatmul.f32.gmra.mxu0 %v655
    %v707 = vpop.f32.mrf.mxu0
    %v708 = vadd.f32 0.0, %v707
    %709 = vmatmul.f32.gmra.mxu0 %v658
    %v710 = vpop.f32.mrf.mxu0
    %v711 = vadd.f32 0.0, %v710
    %712 = vmatmul.f32.gmra.mxu0 %v661
    %v713 = vpop.f32.mrf.mxu0
    %v714 = vadd.f32 0.0, %v713
    %715 = vmatmul.f32.gmra.mxu0 %v664
    %v716 = vpop.f32.mrf.mxu0
    %v717 = vadd.f32 0.0, %v716
    %718 = vmatmul.f32.gmra.mxu0 %v667
    %v719 = vpop.f32.mrf.mxu0
    %v720 = vadd.f32 0.0, %v719
    %721 = vmatmul.f32.gmra.mxu0 %v670
    %v722 = vpop.f32.mrf.mxu0
    %v723 = vadd.f32 0.0, %v722
    %724 = vmatmul.f32.gmra.mxu0 %v673
    %v725 = vpop.f32.mrf.mxu0
    %v726 = vadd.f32 0.0, %v725
    %727 = vmatmul.f32.gmra.mxu0 %v676
    %v728 = vpop.f32.mrf.mxu0
    %v729 = vadd.f32 0.0, %v728
    %730 = vmatmul.f32.gmra.mxu0 %v679
    %v731 = vpop.f32.mrf.mxu0
    %v732 = vadd.f32 0.0, %v731
    %733 = vmatmul.f32.gmra.mxu0 %v682
    %v734 = vpop.f32.mrf.mxu0
    %v735 = vadd.f32 0.0, %v734
    %736 = vmatmul.f32.gmra.mxu0 %v685
    %v737 = vpop.f32.mrf.mxu0
    %v738 = vadd.f32 0.0, %v737
    %739 = vmatmul.f32.gmra.mxu0 %v688
    %v740 = vpop.f32.mrf.mxu0
    %v741 = vadd.f32 0.0, %v740
    %742 = vdwg.mxu0
    %v743 = vmax.f32 %v708, 0.0
    %v744 = vmax.f32 %v711, 0.0
    %v745 = vmax.f32 %v714, 0.0
    %v746 = vmax.f32 %v717, 0.0
    %v747 = vmax.f32 %v720, 0.0
    %v748 = vmax.f32 %v723, 0.0
    %v749 = vmax.f32 %v726, 0.0
    %v750 = vmax.f32 %v729, 0.0
    %v751 = vmax.f32 %v732, 0.0
    %v752 = vmax.f32 %v735, 0.0
    %v753 = vmax.f32 %v738, 0.0
    %v754 = vmax.f32 %v741, 0.0
    %v755 = vld [vmem:[#allocation8 + $0x40] sm:$0xff]
    %v756 = vld [vmem:[#allocation8 + $0x48] sm:$0xff]
    %v757 = vld [vmem:[#allocation8 + $0x50] sm:$0xff]
    %v758 = vld [vmem:[#allocation8 + $0x58] sm:$0xff]
    %v760 = vsel %vm235, %v743, 0
    %v763 = vsel %vm235, %v744, 0
    %v766 = vsel %vm235, %v745, 0
    %v769 = vsel %vm235, %v746, 0
    %v772 = vsel %vm235, %v747, 0
    %v775 = vsel %vm235, %v748, 0
    %v778 = vsel %vm235, %v749, 0
    %v781 = vsel %vm235, %v750, 0
    %v784 = vsel %vm235, %v751, 0
    %v787 = vsel %vm235, %v752, 0
    %v790 = vsel %vm235, %v753, 0
    %v793 = vsel %vm235, %v754, 0
    %795 = vmatpush.msra.mxu0 0.0
    %796 = vmatpush.msra.mxu0 0.0
    %797 = vmatpush.msra.mxu0 0.0
    %798 = vmatpush.msra.mxu0 0.0
    %799 = vmatpush.msra.mxu0 0.0
    %800 = vmatpush.msra.mxu0 0.0
    %801 = vmatpush.msra.mxu0 0.0
    %802 = vmatpush.msra.mxu0 0.0
    %803 = vmatpush.msra.mxu0 0.0
    %804 = vmatpush.msra.mxu0 0.0
    %805 = vmatpush.msra.mxu0 0.0
    %806 = vmatpush.msra.mxu0 0.0
    %807 = vmatpush.msra.mxu0 %v758
    %808 = vmatpush.msra.mxu0 %v757
    %809 = vmatpush.msra.mxu0 %v756
    %810 = vmatpush.msra.mxu0 %v755
    %811 = vmatmul.f32.gmra.mxu0 %v760
    %v812 = vpop.f32.mrf.mxu0
    %v813 = vadd.f32 0.0, %v812
    %814 = vmatmul.f32.gmra.mxu0 %v763
    %v815 = vpop.f32.mrf.mxu0
    %v816 = vadd.f32 0.0, %v815
    %817 = vmatmul.f32.gmra.mxu0 %v766
    %v818 = vpop.f32.mrf.mxu0
    %v819 = vadd.f32 0.0, %v818
    %820 = vmatmul.f32.gmra.mxu0 %v769
    %v821 = vpop.f32.mrf.mxu0
    %v822 = vadd.f32 0.0, %v821
    %823 = vmatmul.f32.gmra.mxu0 %v772
    %v824 = vpop.f32.mrf.mxu0
    %v825 = vadd.f32 0.0, %v824
    %826 = vmatmul.f32.gmra.mxu0 %v775
    %v827 = vpop.f32.mrf.mxu0
    %v828 = vadd.f32 0.0, %v827
    %829 = vmatmul.f32.gmra.mxu0 %v778
    %v830 = vpop.f32.mrf.mxu0
    %v831 = vadd.f32 0.0, %v830
    %832 = vmatmul.f32.gmra.mxu0 %v781
    %v833 = vpop.f32.mrf.mxu0
    %v834 = vadd.f32 0.0, %v833
    %835 = vmatmul.f32.gmra.mxu0 %v784
    %v836 = vpop.f32.mrf.mxu0
    %v837 = vadd.f32 0.0, %v836
    %838 = vmatmul.f32.gmra.mxu0 %v787
    %v839 = vpop.f32.mrf.mxu0
    %v840 = vadd.f32 0.0, %v839
    %841 = vmatmul.f32.gmra.mxu0 %v790
    %v842 = vpop.f32.mrf.mxu0
    %v843 = vadd.f32 0.0, %v842
    %844 = vmatmul.f32.gmra.mxu0 %v793
    %v845 = vpop.f32.mrf.mxu0
    %v846 = vadd.f32 0.0, %v845
    %847 = vdwg.mxu0
    %v848 = vmax.f32 %v813, 0.0
    %v849 = vmax.f32 %v816, 0.0
    %v850 = vmax.f32 %v819, 0.0
    %v851 = vmax.f32 %v822, 0.0
    %v852 = vmax.f32 %v825, 0.0
    %v853 = vmax.f32 %v828, 0.0
    %v854 = vmax.f32 %v831, 0.0
    %v855 = vmax.f32 %v834, 0.0
    %v856 = vmax.f32 %v837, 0.0
    %v857 = vmax.f32 %v840, 0.0
    %v858 = vmax.f32 %v843, 0.0
    %v859 = vmax.f32 %v846, 0.0
    %v860 = vld [vmem:[#allocation8 + $0x60] sm:$0xff]
    %v861 = vld [vmem:[#allocation8 + $0x68] sm:$0xff]
    %v862 = vld [vmem:[#allocation8 + $0x70] sm:$0xff]
    %v863 = vld [vmem:[#allocation8 + $0x78] sm:$0xff]
    %v865 = vsel %vm235, %v848, 0
    %v868 = vsel %vm235, %v849, 0
    %v871 = vsel %vm235, %v850, 0
    %v874 = vsel %vm235, %v851, 0
    %v877 = vsel %vm235, %v852, 0
    %v880 = vsel %vm235, %v853, 0
    %v883 = vsel %vm235, %v854, 0
    %v886 = vsel %vm235, %v855, 0
    %v889 = vsel %vm235, %v856, 0
    %v892 = vsel %vm235, %v857, 0
    %v895 = vsel %vm235, %v858, 0
    %v898 = vsel %vm235, %v859, 0
    %900 = vmatpush.msra.mxu0 0.0
    %901 = vmatpush.msra.mxu0 0.0
    %902 = vmatpush.msra.mxu0 0.0
    %903 = vmatpush.msra.mxu0 0.0
    %904 = vmatpush.msra.mxu0 0.0
    %905 = vmatpush.msra.mxu0 0.0
    %906 = vmatpush.msra.mxu0 0.0
    %907 = vmatpush.msra.mxu0 0.0
    %908 = vmatpush.msra.mxu0 0.0
    %909 = vmatpush.msra.mxu0 0.0
    %910 = vmatpush.msra.mxu0 0.0
    %911 = vmatpush.msra.mxu0 0.0
    %912 = vmatpush.msra.mxu0 %v863
    %913 = vmatpush.msra.mxu0 %v862
    %914 = vmatpush.msra.mxu0 %v861
    %915 = vmatpush.msra.mxu0 %v860
    %916 = vmatmul.f32.gmra.mxu0 %v865
    %v917 = vpop.f32.mrf.mxu0
    %v918 = vadd.f32 0.0, %v917
    %919 = vmatmul.f32.gmra.mxu0 %v868
    %v920 = vpop.f32.mrf.mxu0
    %v921 = vadd.f32 0.0, %v920
    %922 = vmatmul.f32.gmra.mxu0 %v871
    %v923 = vpop.f32.mrf.mxu0
    %v924 = vadd.f32 0.0, %v923
    %925 = vmatmul.f32.gmra.mxu0 %v874
    %v926 = vpop.f32.mrf.mxu0
    %v927 = vadd.f32 0.0, %v926
    %928 = vmatmul.f32.gmra.mxu0 %v877
    %v929 = vpop.f32.mrf.mxu0
    %v930 = vadd.f32 0.0, %v929
    %931 = vmatmul.f32.gmra.mxu0 %v880
    %v932 = vpop.f32.mrf.mxu0
    %v933 = vadd.f32 0.0, %v932
    %934 = vmatmul.f32.gmra.mxu0 %v883
    %v935 = vpop.f32.mrf.mxu0
    %v936 = vadd.f32 0.0, %v935
    %937 = vmatmul.f32.gmra.mxu0 %v886
    %v938 = vpop.f32.mrf.mxu0
    %v939 = vadd.f32 0.0, %v938
    %940 = vmatmul.f32.gmra.mxu0 %v889
    %v941 = vpop.f32.mrf.mxu0
    %v942 = vadd.f32 0.0, %v941
    %943 = vmatmul.f32.gmra.mxu0 %v892
    %v944 = vpop.f32.mrf.mxu0
    %v945 = vadd.f32 0.0, %v944
    %946 = vmatmul.f32.gmra.mxu0 %v895
    %v947 = vpop.f32.mrf.mxu0
    %v948 = vadd.f32 0.0, %v947
    %949 = vmatmul.f32.gmra.mxu0 %v898
    %v950 = vpop.f32.mrf.mxu0
    %v951 = vadd.f32 0.0, %v950
    %952 = vdwg.mxu0
    %953 = vst [vmem:[#allocation10] sm:$0xff] %v918
    %954 = vst [vmem:[#allocation10 + $0x8] sm:$0xff] %v921
    %955 = vst [vmem:[#allocation10 + $0x10] sm:$0xff] %v924
    %956 = vst [vmem:[#allocation10 + $0x18] sm:$0xff] %v927
    %957 = vst [vmem:[#allocation10 + $0x20] sm:$0xff] %v930
    %958 = vst [vmem:[#allocation10 + $0x28] sm:$0xff] %v933
    %959 = vst [vmem:[#allocation10 + $0x30] sm:$0xff] %v936
    %960 = vst [vmem:[#allocation10 + $0x38] sm:$0xff] %v939
    %961 = vst [vmem:[#allocation10 + $0x40] sm:$0xff] %v942
    %962 = vst [vmem:[#allocation10 + $0x48] sm:$0xff] %v945
    %963 = vst [vmem:[#allocation10 + $0x50] sm:$0xff] %v948
    %964 = vst [vmem:[#allocation10 + $0x58] sm:$0xff] %v951
    // Predicated region
    $region34: #{tab_neutral_ad_forward.1} parent=1 // pred_check
      _
    $region35: #{tab_neutral_ad_forward.1} parent=1 // pred_check_branch
      %966 = sbr.rel (0) target = $region37
    $region36: #{tab_neutral_ad_forward.1} parent=1 // pred_region
      %968 = vsyncadd [#allocation4], 0
      %s970 = sshll.u32 [#allocation10], 4
      %s971 = int_to_ptr.vmem [resolvable:$true] %s970
      %s972 = sshll.u32 %s4, 4
      %s973 = int_to_ptr.hbm [resolvable:$true] %s972
      %975 = dma.vmem_to_hbm [thread:$0]  %s971, 1536, %s973, [#allocation4]
    $region37: #{tab_neutral_ad_forward.1} parent=1 // pred_fallthru
      _
    // Predicated region
    $region38: #{tab_neutral_ad_forward.1} parent=1 // pred_check
      _
    $region39: #{tab_neutral_ad_forward.1} parent=1 // pred_check_branch
      %977 = sbr.rel (0) target = $region41
    $region40: #{tab_neutral_ad_forward.1} parent=1 // pred_region
      %979 = dma.done [#allocation4], 1536
    $region41: #{tab_neutral_ad_forward.1} parent=1 // pred_fallthru
      _
    %980 = vsyncpa [#allocation3], 1
    %981 = vsyncpa [#allocation6], 1
    %982 = vsyncpa [#allocation9], 1
    %983 = vsyncpa [#allocation4], 1

</llo_original>
